<compile_context>
chip_gen: v6e
topology: v6e:2x2x1
jax: 0.10.0
libtpu: 0.0.40
codegen_flags: <defaults>
</compile_context>

<pallas_src>
import functools

import jax
import jax.numpy as jnp
from jax.experimental import pallas as pl
from jax.experimental.pallas import tpu as pltpu


def _round_up(n: int, m: int) -> int:
    return ((n + m - 1) // m) * m


def linear_kernel(x_ref, w_ref, b_ref, o_ref):
    # y = x @ W_t + b ; W_t is the lane-dense (D, 256) pre-transposed weight.
    y = jnp.dot(x_ref[...], w_ref[...], preferred_element_type=jnp.float32)
    o_ref[...] = (y + b_ref[...]).astype(o_ref.dtype)


@functools.partial(jax.jit, static_argnames=("block_batch", "out_dtype"))
def _peptide_linear_pallas(x, weight, bias, *, block_batch=4096,
                           out_dtype=jnp.float32):
    """Pallas path: y = x @ weight.T + bias.

    x:      (B, D)   f32
    weight: (256, D) f32  (PyTorch nn.Linear layout: out_features, in_features)
    bias:   (256,)   f32
    """
    B, D = x.shape
    out_dim, D_w = weight.shape
    assert D == D_w, "feature dim mismatch"

    # Batch tile: multiple of 8 sublanes, capped by the requested block size.
    # TB=4096 f32 -> 8 MiB double-buffered output tile; safe on v7x's smaller
    # (64 MiB physical / 32 MiB scoped) per-TC VMEM as well as v5e/v6e.
    TB = min(_round_up(block_batch, 8), _round_up(B, 8))
    grid = (pl.cdiv(B, TB),)

    # One-time 16 KiB transpose to lane-dense (D, 256); metadata reshape of
    # the bias to (1, 256).  Both are negligible next to the output traffic.
    w_t = weight.T
    bias2 = bias.reshape(1, out_dim)

    out_itemsize = jnp.dtype(out_dtype).itemsize
    cost = pl.CostEstimate(
        flops=2 * B * D * out_dim,
        transcendentals=0,
        bytes_accessed=4 * (B * D + D * out_dim + out_dim)
        + out_itemsize * B * out_dim,
    )

    vmem = pltpu.MemorySpace.VMEM
    return pl.pallas_call(
        linear_kernel,
        out_shape=jax.ShapeDtypeStruct((B, out_dim), out_dtype),
        grid=grid,
        in_specs=[
            # x: one batch tile per grid step (double-buffered by Pallas).
            pl.BlockSpec((TB, D), lambda i: (i, 0), memory_space=vmem),
            # weight: constant block index -> stays VMEM-resident.
            pl.BlockSpec((D, out_dim), lambda i: (0, 0), memory_space=vmem),
            # bias: constant block index -> stays VMEM-resident.
            pl.BlockSpec((1, out_dim), lambda i: (0, 0), memory_space=vmem),
        ],
        out_specs=pl.BlockSpec((TB, out_dim), lambda i: (i, 0),
                               memory_space=vmem),
        compiler_params=pltpu.CompilerParams(
            # Batch tiles are independent; lets megacore/multi-TC parts split
            # the grid.
            dimension_semantics=("parallel",),
        ),
        cost_estimate=cost,
    )(x, w_t, bias2)


def peptide_info_nn_forward(x, weight, bias, *, block_batch=4096,
                            out_dtype=jnp.float32, force_pallas=False):
    """Forward pass of peptideInfoNN: Linear(D -> 256)."""
    B = x.shape[0]
    out_dim = weight.shape[0]
    # Small-B bypass: below ~1 MiB of output the pallas_call dispatch cost
    # dominates and plain XLA wins.
    if not force_pallas and B * out_dim * 4 < (1 << 20):
        y = jnp.dot(x, weight.T, preferred_element_type=jnp.float32) + bias
        return y.astype(out_dtype)
    return _peptide_linear_pallas(x, weight, bias, block_batch=block_batch,
                                  out_dtype=out_dtype)


if __name__ == "__main__":
    # Small shapes consistent with the module:
    # batch_size=8, length_peptide_sequence=16 -> output_dimension (D) = 16.
    batch_size = 8
    length_of_sequence = 16
    out_features = 256

    key = jax.random.PRNGKey(0)
    k_x, k_w, k_b = jax.random.split(key, 3)

    # Input: flattened (batch, length*1) peptide tensor.
    x = jax.random.uniform(
        k_x, (batch_size, length_of_sequence), dtype=jnp.float32)

    # Parameter init mirroring _create_weights:
    #   weight ~ Normal(0, 0.05); bias keeps PyTorch Linear default
    #   Uniform(-1/sqrt(in_features), 1/sqrt(in_features)).
    weight = 0.05 * jax.random.normal(
        k_w, (out_features, length_of_sequence), dtype=jnp.float32)
    bound = 1.0 / jnp.sqrt(jnp.float32(length_of_sequence))
    bias = jax.random.uniform(
        k_b, (out_features,), minval=-bound, maxval=bound, dtype=jnp.float32)

    y_ref = x @ weight.T + bias

    # 1) Pallas path (forced so the kernel is exercised at this tiny shape).
    y = jax.block_until_ready(
        peptide_info_nn_forward(x, weight, bias, force_pallas=True))
    assert y.shape == (batch_size, out_features)
    assert jnp.allclose(y, y_ref, atol=1e-5, rtol=1e-5)

    # 2) Dispatcher's small-B XLA bypass agrees with the same numerics.
    y_fast = jax.block_until_ready(peptide_info_nn_forward(x, weight, bias))
    assert jnp.allclose(y_fast, y_ref, atol=1e-5, rtol=1e-5)

    # 3) Ragged-B, multi-tile grid path: B=20 with TB=8 -> grid=3, the last
    #    block is partial and masked by Pallas (no host-side pad / slice).
    x2 = jax.random.uniform(
        jax.random.PRNGKey(1), (20, length_of_sequence), dtype=jnp.float32)
    y2 = jax.block_until_ready(
        peptide_info_nn_forward(x2, weight, bias, block_batch=8,
                                force_pallas=True))
    y2_ref = x2 @ weight.T + bias
    assert y2.shape == (20, out_features)
    assert jnp.allclose(y2, y2_ref, atol=1e-5, rtol=1e-5)

    print("KERNEL_OK")
</pallas_src>

<mosaic_0001>
module attributes {stable_mosaic.version = 11 : i64} {
  func.func @linear_kernel(%arg0: i32, %arg1: memref<8x16xf32, #tpu.memory_space<vmem>>, %arg2: memref<16x256xf32, #tpu.memory_space<vmem>>, %arg3: memref<1x256xf32, #tpu.memory_space<vmem>>, %arg4: memref<8x256xf32, #tpu.memory_space<vmem>>) attributes {dimension_semantics = [#tpu.dimension_semantics<parallel>], iteration_bounds = array<i64: 1>, scalar_prefetch = 0 : i64, scratch_operands = 0 : i64, tpu.core_type = #tpu.core_type<tc>, window_params = [{transform_indices = @transform_0, window_bounds = array<i64: 8, 16>}, {pipeline_mode = #tpu.pipeline_mode<synchronous>, transform_indices = @transform_1, window_bounds = array<i64: 16, 256>}, {pipeline_mode = #tpu.pipeline_mode<synchronous>, transform_indices = @transform_2, window_bounds = array<i64: 1, 256>}, {transform_indices = @transform_3, window_bounds = array<i64: 8, 256>}]} {
    %c0 = arith.constant 0 : index
    %c0_0 = arith.constant 0 : index
    %0 = vector.load %arg1[%c0, %c0_0] : memref<8x16xf32, #tpu.memory_space<vmem>>, vector<8x16xf32>
    %c0_1 = arith.constant 0 : index
    %c0_2 = arith.constant 0 : index
    %1 = vector.load %arg2[%c0_1, %c0_2] : memref<16x256xf32, #tpu.memory_space<vmem>>, vector<16x256xf32>
    %cst = arith.constant dense<0.000000e+00> : vector<8x256xf32>
    %2 = tpu.matmul %0, %1, %cst {dimension_numbers = #tpu.dot_dimension_numbers<[1], [0], [0], [1], [0, 0, 1, 1], [], []>} : vector<8x16xf32>, vector<16x256xf32>, vector<8x256xf32> -> vector<8x256xf32>
    %c0_3 = arith.constant 0 : index
    %c0_4 = arith.constant 0 : index
    %3 = vector.load %arg3[%c0_3, %c0_4] : memref<1x256xf32, #tpu.memory_space<vmem>>, vector<1x256xf32>
    %4 = vector.broadcast %3 : vector<1x256xf32> to vector<8x256xf32>
    %5 = arith.addf %2, %4 : vector<8x256xf32>
    %c0_5 = arith.constant 0 : index
    %c0_6 = arith.constant 0 : index
    %6 = vector.load %arg4[%c0_5, %c0_6] : memref<8x256xf32, #tpu.memory_space<vmem>>, vector<8x256xf32>
    tpu.vector_store %arg4[%c0_5, %c0_6], %5 {strides = array<i32>} : memref<8x256xf32, #tpu.memory_space<vmem>>, vector<8x256xf32>,
    return
  }
  func.func @transform_0(%arg0: i32) -> (i32, i32) {
    %c0_i32 = arith.constant 0 : i32
    %c0_i32_0 = arith.constant 0 : i32
    return %arg0, %c0_i32 : i32, i32
  }
  func.func @transform_1(%arg0: i32) -> (i32, i32) {
    %c0_i32 = arith.constant 0 : i32
    %c0_i32_0 = arith.constant 0 : i32
    %c0_i32_1 = arith.constant 0 : i32
    return %c0_i32, %c0_i32_0 : i32, i32
  }
  func.func @transform_2(%arg0: i32) -> (i32, i32) {
    %c0_i32 = arith.constant 0 : i32
    %c0_i32_0 = arith.constant 0 : i32
    %c0_i32_1 = arith.constant 0 : i32
    return %c0_i32, %c0_i32_0 : i32, i32
  }
  func.func @transform_3(%arg0: i32) -> (i32, i32) {
    %c0_i32 = arith.constant 0 : i32
    %c0_i32_0 = arith.constant 0 : i32
    return %arg0, %c0_i32 : i32, i32
  }
}

</mosaic_0001>

<llo_original>
// kernel: _peptide_linear_pallas.1
$region0: #{_peptide_linear_pallas.1}
  #allocation0 [shape = 'u32[]', space=smem, size = 0x4, offset = 0x4, fixed_abs, tag = 'smem constant byte address 0x4 - core index']
  #allocation1 [shape = 'u32[144,128]{1,0:T(1,128)}', space=vmem, size = 0x12000, scoped, tag = 'internal scratch']
  %s0 = inlined_call_operand.hbm [shape: f32[8,16], index: 0, kind: input, shape index: {}]
  %s1 = inlined_call_operand.hbm [shape: f32[16,256], index: 1, kind: input, shape index: {}]
  %s2 = inlined_call_operand.vmem [shape: f32[1,256], index: 2, kind: input, shape index: {}]
  %s3 = inlined_call_operand.hbm [shape: f32[8,256], index: 3, kind: output, shape index: {}]
  %s4 = sld [smem:[#allocation0]]
  $region30: #{_peptide_linear_pallas.1} parent=0
    _
  %s6 = ssub.s32 1, %s4
  %s7 = scalar_select 0, %s6, %s4
  $region1: #{_peptide_linear_pallas.1} parent=0
    #allocation2 [shape = 'u8[4096]{0}', space=vmem, size = 0x1000, scoped, tag = 'input window, operand 0, single buffered']
    #allocation3 [shape = 's32[1]{0}', space=sflag, size = 0x4, scoped, tag = 'scoped memory for _peptide_linear_pallas.1']
    #allocation4 [shape = 's32[1]{0}', space=sflag, size = 0x4, scoped, tag = 'scoped memory for _peptide_linear_pallas.1']
    #allocation5 [shape = 'u8[16384]{0}', space=vmem, size = 0x4000, scoped, tag = 'input window, operand 1, single buffered']
    #allocation6 [shape = 's32[1]{0}', space=sflag, size = 0x4, scoped, tag = 'scoped memory for _peptide_linear_pallas.1']
    #allocation7 [shape = 'u8[8192]{0}', space=vmem, size = 0x2000, scoped, tag = 'output window, operand 0, single buffered']
    %8 = vsyncpa [#allocation3], 0
    %9 = vsyncpa [#allocation6], 0
    %10 = vsyncpa [#allocation4], 0
    // Predicated region
    $region2: #{_peptide_linear_pallas.1} parent=1 // pred_check
      _
    $region3: #{_peptide_linear_pallas.1} parent=1 // pred_check_branch
      %12 = sbr.rel (0) target = $region5
    $region4: #{_peptide_linear_pallas.1} parent=1 // pred_region
      %s14 = ssub.s32 128, 128
      %15 = vsyncadd [#allocation3], %s14
      %s17 = sshll.u32 [#allocation2], 4
      %s18 = int_to_ptr.vmem [resolvable:$true] %s17
      %20 = dma.hbm_to_vmem [thread:$0]  %s0, 128, %s18, [#allocation3]
    $region5: #{_peptide_linear_pallas.1} parent=1 // pred_fallthru
      _
    // Predicated region
    $region6: #{_peptide_linear_pallas.1} parent=1 // pred_check
      _
    $region7: #{_peptide_linear_pallas.1} parent=1 // pred_check_branch
      %22 = sbr.rel (0) target = $region9
    $region8: #{_peptide_linear_pallas.1} parent=1 // pred_region
      %s24 = ssub.s32 512, 512
      %25 = vsyncadd [#allocation6], %s24
      %s26 = sshll.u32 [#allocation5], 4
      %s27 = int_to_ptr.vmem [resolvable:$true] %s26
      %32 = dma.hbm_to_vmem [thread:$0]  %s1, 512, %s27, [#allocation6], 256, 256, 16
    $region9: #{_peptide_linear_pallas.1} parent=1 // pred_fallthru
      _
    // Predicated region
    $region10: #{_peptide_linear_pallas.1} parent=1 // pred_check
      _
    $region11: #{_peptide_linear_pallas.1} parent=1 // pred_check_branch
      %34 = sbr.rel (0) target = $region13
    $region12: #{_peptide_linear_pallas.1} parent=1 // pred_region
      _
    $region13: #{_peptide_linear_pallas.1} parent=1 // pred_fallthru
      _
    // Predicated region
    $region14: #{_peptide_linear_pallas.1} parent=1 // pred_check
      _
    $region15: #{_peptide_linear_pallas.1} parent=1 // pred_check_branch
      %36 = sbr.rel (0) target = $region17
    $region16: #{_peptide_linear_pallas.1} parent=1 // pred_region
      %37 = dma.done [#allocation3], 128
    $region17: #{_peptide_linear_pallas.1} parent=1 // pred_fallthru
      _
    // Predicated region
    $region18: #{_peptide_linear_pallas.1} parent=1 // pred_check
      _
    $region19: #{_peptide_linear_pallas.1} parent=1 // pred_check_branch
      %39 = sbr.rel (0) target = $region21
    $region20: #{_peptide_linear_pallas.1} parent=1 // pred_region
      %40 = dma.done [#allocation6], 512
    $region21: #{_peptide_linear_pallas.1} parent=1 // pred_fallthru
      _
    %v41 = vld [vmem:[#allocation2] sm:$0xff]
    %v42 = vld [vmem:[#allocation5] sm:$0xff]
    %v43 = vld [vmem:[#allocation5 + $0x8] sm:$0xff]
    %v44 = vld [vmem:[#allocation5 + $0x10] sm:$0xff]
    %v45 = vld [vmem:[#allocation5 + $0x18] sm:$0xff]
    %v46 = vld [vmem:[%s2] sm:$0x3]
    %v48 = vlaneseq
    %v49 = vshrl.u32 %v48, 7
    %v50 = vsub.s32 0, %v49
    %v51 = vrot.slane %v46, %v50
    %v52 = vlaneseq
    %v53 = vshrl.u32 %v52, 7
    %v54 = vsub.s32 1, %v53
    %v55 = vrot.slane %v46, %v54
    %vm58 = vcmask 130048
    %v60 = vsel %vm58, %v41, 0
    %62 = vmatprep.subr.mxu0 0.0
    %63 = vmatpush1.msra.mxu0 0.0
    %64 = vmatprep.subr.mxu0 0.0
    %65 = vmatpush1.msra.mxu0 0.0
    %66 = vmatprep.subr.mxu0 0.0
    %67 = vmatpush1.msra.mxu0 0.0
    %68 = vmatprep.subr.mxu0 0.0
    %69 = vmatpush1.msra.mxu0 0.0
    %70 = vmatprep.subr.mxu0 0.0
    %71 = vmatpush1.msra.mxu0 0.0
    %72 = vmatprep.subr.mxu0 0.0
    %73 = vmatpush1.msra.mxu0 0.0
    %74 = vmatprep.subr.mxu0 0.0
    %75 = vmatpush1.msra.mxu0 0.0
    %76 = vmatprep.subr.mxu0 0.0
    %77 = vmatpush1.msra.mxu0 0.0
    %78 = vmatprep.subr.mxu0 0.0
    %79 = vmatpush1.msra.mxu0 0.0
    %80 = vmatprep.subr.mxu0 0.0
    %81 = vmatpush1.msra.mxu0 0.0
    %82 = vmatprep.subr.mxu0 0.0
    %83 = vmatpush1.msra.mxu0 0.0
    %84 = vmatprep.subr.mxu0 0.0
    %85 = vmatpush1.msra.mxu0 0.0
    %86 = vmatprep.subr.mxu0 0.0
    %87 = vmatpush1.msra.mxu0 0.0
    %88 = vmatprep.subr.mxu0 0.0
    %89 = vmatpush1.msra.mxu0 0.0
    %90 = vmatprep.subr.mxu0 %v45
    %91 = vmatpush1.msra.mxu0 %v44
    %92 = vmatprep.subr.mxu0 %v43
    %93 = vmatpush1.msra.mxu0 %v42
    %94 = vmatprep.subr.mxu0 0.0
    %95 = vmatpush2.msra.mxu0 0.0
    %96 = vmatprep.subr.mxu0 0.0
    %97 = vmatpush2.msra.mxu0 0.0
    %98 = vmatprep.subr.mxu0 0.0
    %99 = vmatpush2.msra.mxu0 0.0
    %100 = vmatprep.subr.mxu0 0.0
    %101 = vmatpush2.msra.mxu0 0.0
    %102 = vmatprep.subr.mxu0 0.0
    %103 = vmatpush2.msra.mxu0 0.0
    %104 = vmatprep.subr.mxu0 0.0
    %105 = vmatpush2.msra.mxu0 0.0
    %106 = vmatprep.subr.mxu0 0.0
    %107 = vmatpush2.msra.mxu0 0.0
    %108 = vmatprep.subr.mxu0 0.0
    %109 = vmatpush2.msra.mxu0 0.0
    %110 = vmatprep.subr.mxu0 0.0
    %111 = vmatpush2.msra.mxu0 0.0
    %112 = vmatprep.subr.mxu0 0.0
    %113 = vmatpush2.msra.mxu0 0.0
    %114 = vmatprep.subr.mxu0 0.0
    %115 = vmatpush2.msra.mxu0 0.0
    %116 = vmatprep.subr.mxu0 0.0
    %117 = vmatpush2.msra.mxu0 0.0
    %118 = vmatprep.subr.mxu0 0.0
    %119 = vmatpush2.msra.mxu0 0.0
    %120 = vmatprep.subr.mxu0 0.0
    %121 = vmatpush2.msra.mxu0 0.0
    %122 = vmatprep.subr.mxu0 0.0
    %123 = vmatpush2.msra.mxu0 0.0
    %124 = vmatprep.subr.mxu0 0.0
    %125 = vmatpush2.msra.mxu0 0.0
    %126 = vmatprep.mubr.f32.mxu0 0.0
    %127 = vmatmul.mubr.f32.gmra.mxu0 %v60
    %v128 = vpop.f32.mrf.mxu0
    %v129 = vadd.f32 %v51, %v128
    %v130 = vpop.f32.mrf.mxu0
    %v131 = vadd.f32 %v55, %v130
    %132 = vdwg.mxu0
    %133 = vst [vmem:[#allocation7] sm:$0xff] %v129
    %134 = vst [vmem:[#allocation7 + $0x8] sm:$0xff] %v131
    // Predicated region
    $region22: #{_peptide_linear_pallas.1} parent=1 // pred_check
      _
    $region23: #{_peptide_linear_pallas.1} parent=1 // pred_check_branch
      %136 = sbr.rel (0) target = $region25
    $region24: #{_peptide_linear_pallas.1} parent=1 // pred_region
      %s138 = ssub.s32 256, 256
      %139 = vsyncadd [#allocation4], %s138
      %s141 = sshll.u32 [#allocation7], 4
      %s142 = int_to_ptr.vmem [resolvable:$true] %s141
      %144 = dma.vmem_to_hbm [thread:$0]  %s142, 256, %s3, [#allocation4]
    $region25: #{_peptide_linear_pallas.1} parent=1 // pred_fallthru
      _
    // Predicated region
    $region26: #{_peptide_linear_pallas.1} parent=1 // pred_check
      _
    $region27: #{_peptide_linear_pallas.1} parent=1 // pred_check_branch
      %146 = sbr.rel (0) target = $region29
    $region28: #{_peptide_linear_pallas.1} parent=1 // pred_region
      %147 = dma.done [#allocation4], 256
    $region29: #{_peptide_linear_pallas.1} parent=1 // pred_fallthru
      _
    %148 = vsyncpa [#allocation3], 1
    %149 = vsyncpa [#allocation6], 1
    %150 = vsyncpa [#allocation4], 1

</llo_original>
